<compile_context>
chip_gen: v6e
topology: v6e:2x2x1
jax: 0.10.0
libtpu: 0.0.40
codegen_flags: <defaults>
</compile_context>

<pallas_src>
import functools

import jax
import jax.numpy as jnp
from jax.experimental import pallas as pl
from jax.experimental.pallas import tpu as pltpu


_LANES = 1024                  # lane-dense width (big multiple of 128 -> unmasked vst)
_TARGET_BLOCK_BYTES = 2 << 20  # ~2 MiB per state block; 3 streams x double-buffer
                               # (+ f32 uniforms) stays well under every gen's VMEM.


def _round_up(a, b):
    return ((a + b - 1) // b) * b


def _zoneout_kernel(p, x_old_ref, x_new_ref, u_ref, o_ref):
    # keep_old ~ Bernoulli(p): uniform-in-[0,1) threshold compare, pure VPU work.
    keep_old = u_ref[...] < p
    o_ref[...] = jnp.where(keep_old, x_old_ref[...], x_new_ref[...])


def zoneout_pallas(x_old, x_new, p=0.5, training=True, key=None):
    """Zoneout forward: keep each element of the old state w.p. p during training.

    NOTE: for tiny states (a few KiB) a fused host-level jnp.where is faster
    than any custom-call launch; the Pallas path is used unconditionally here
    so the kernel is exercised by the demo.
    """
    assert x_old.shape == x_new.shape
    assert x_old.dtype == x_new.dtype

    # Eval / p == 0 path of the reference module: passthrough of the new state.
    if p == 0 or not training:
        return x_new
    assert 0 < p < 1

    if key is None:
        key = jax.random.PRNGKey(0)

    orig_shape = x_old.shape
    dtype = x_old.dtype
    n = x_old.size
    dtype_bytes = jnp.dtype(dtype).itemsize

    # Elementwise op -> free to re-tile the flattened slab lane-dense.
    cols = _LANES
    rows = pl.cdiv(n, cols)
    # Row-block target ~2 MiB of state dtype, rounded to a multiple of 32 so
    # the sublane packing is valid for f32 / bf16 / int8 alike.
    target_rows = max(32, (_TARGET_BLOCK_BYTES // (cols * dtype_bytes) // 32) * 32)
    if rows <= target_rows:
        block_rows = rows            # single block: block shape == full array dims
        rows_padded = rows
    else:
        block_rows = target_rows
        rows_padded = _round_up(rows, block_rows)
    padded_n = rows_padded * cols

    def _prep(x):
        flat = x.reshape(-1)
        if padded_n != n:
            flat = jnp.pad(flat, (0, padded_n - n))
        return flat.reshape(rows_padded, cols)

    xo2 = _prep(x_old)
    xn2 = _prep(x_new)

    # Host-side random stream (portable across TPU / interpret mode).
    # TODO(synk): on real TPU, in-kernel pltpu.prng_seed/prng_random_bits would
    # remove this extra 4*N bytes of HBM read traffic; it has no interpret-mode
    # lowering, so the portable host-side stream is used instead.
    u2 = jax.random.uniform(key, (rows_padded, cols), dtype=jnp.float32)

    grid = (rows_padded // block_rows,)
    block = (block_rows, cols)
    spec = pl.BlockSpec(block, lambda i: (i, 0))

    out2 = pl.pallas_call(
        functools.partial(_zoneout_kernel, float(p)),
        out_shape=jax.ShapeDtypeStruct((rows_padded, cols), dtype),
        grid=grid,
        in_specs=[spec, spec, spec],
        out_specs=spec,
        compiler_params=pltpu.CompilerParams(
            # Tiles are independent (pure elementwise): shard across both
            # TensorCores on v7x; no-op on single-TC v5e/v6e.
            dimension_semantics=("parallel",),
            # Raise v5e's 16 MiB scoped default; stays under v7x's 64 MiB VMEM.
            vmem_limit_bytes=48 << 20,
        ),
        cost_estimate=pl.CostEstimate(
            flops=padded_n,
            transcendentals=0,
            bytes_accessed=padded_n * (3 * dtype_bytes + 4),
        ),
    )(xo2, xn2, u2)

    return out2.reshape(-1)[:n].reshape(orig_shape)


if __name__ == "__main__":
    key = jax.random.PRNGKey(0)
    k_old, k_new, k_mask = jax.random.split(key, 3)

    batch, hidden = 8, 256  # small RNN-hidden-like shapes
    x_old = jax.random.normal(k_old, (batch, hidden), dtype=jnp.float32)
    x_new = jax.random.normal(k_new, (batch, hidden), dtype=jnp.float32)

    p = 0.5

    out = zoneout_pallas(x_old, x_new, p=p, training=True, key=k_mask)
    out = jax.block_until_ready(out)

    # Sanity: every output element must equal x_old or x_new at that position.
    is_old = out == x_old
    is_new = out == x_new
    assert bool(jnp.all(is_old | is_new)), "output not a per-element select"
    # Fraction kept from x_old should be roughly p.
    frac_old = float(jnp.mean(is_old.astype(jnp.float32)))
    assert 0.25 < frac_old < 0.75, f"mask rate {frac_old} far from p={p}"

    # Eval / p==0 path: passthrough of x_new.
    out_eval = zoneout_pallas(x_old, x_new, p=p, training=False)
    assert bool(jnp.all(out_eval == x_new))

    print("KERNEL_OK")
</pallas_src>

<mosaic_0001>
module attributes {stable_mosaic.version = 11 : i64} {
  func.func @_zoneout_kernel(%arg0: i32, %arg1: memref<2x1024xf32, #tpu.memory_space<vmem>>, %arg2: memref<2x1024xf32, #tpu.memory_space<vmem>>, %arg3: memref<2x1024xf32, #tpu.memory_space<vmem>>, %arg4: memref<2x1024xf32, #tpu.memory_space<vmem>>) attributes {dimension_semantics = [#tpu.dimension_semantics<parallel>], iteration_bounds = array<i64: 1>, scalar_prefetch = 0 : i64, scratch_operands = 0 : i64, tpu.core_type = #tpu.core_type<tc>, window_params = [{transform_indices = @transform_0, window_bounds = array<i64: 2, 1024>}, {transform_indices = @transform_1, window_bounds = array<i64: 2, 1024>}, {transform_indices = @transform_2, window_bounds = array<i64: 2, 1024>}, {transform_indices = @transform_3, window_bounds = array<i64: 2, 1024>}]} {
    %c0 = arith.constant 0 : index
    %c0_0 = arith.constant 0 : index
    %0 = vector.load %arg3[%c0, %c0_0] : memref<2x1024xf32, #tpu.memory_space<vmem>>, vector<2x1024xf32>
    %cst = arith.constant 5.000000e-01 : f32
    %1 = vector.broadcast %cst : f32 to vector<2x1024xf32>
    %2 = arith.cmpf olt, %0, %1 : vector<2x1024xf32>
    %c0_1 = arith.constant 0 : index
    %c0_2 = arith.constant 0 : index
    %3 = vector.load %arg1[%c0_1, %c0_2] : memref<2x1024xf32, #tpu.memory_space<vmem>>, vector<2x1024xf32>
    %c0_3 = arith.constant 0 : index
    %c0_4 = arith.constant 0 : index
    %4 = vector.load %arg2[%c0_3, %c0_4] : memref<2x1024xf32, #tpu.memory_space<vmem>>, vector<2x1024xf32>
    %5 = arith.select %2, %3, %4 : vector<2x1024xi1>, vector<2x1024xf32>
    %c0_5 = arith.constant 0 : index
    %c0_6 = arith.constant 0 : index
    %6 = vector.load %arg4[%c0_5, %c0_6] : memref<2x1024xf32, #tpu.memory_space<vmem>>, vector<2x1024xf32>
    tpu.vector_store %arg4[%c0_5, %c0_6], %5 {strides = array<i32>} : memref<2x1024xf32, #tpu.memory_space<vmem>>, vector<2x1024xf32>,
    return
  }
  func.func @transform_0(%arg0: i32) -> (i32, i32) {
    %c0_i32 = arith.constant 0 : i32
    %c0_i32_0 = arith.constant 0 : i32
    return %arg0, %c0_i32 : i32, i32
  }
  func.func @transform_1(%arg0: i32) -> (i32, i32) {
    %c0_i32 = arith.constant 0 : i32
    %c0_i32_0 = arith.constant 0 : i32
    return %arg0, %c0_i32 : i32, i32
  }
  func.func @transform_2(%arg0: i32) -> (i32, i32) {
    %c0_i32 = arith.constant 0 : i32
    %c0_i32_0 = arith.constant 0 : i32
    return %arg0, %c0_i32 : i32, i32
  }
  func.func @transform_3(%arg0: i32) -> (i32, i32) {
    %c0_i32 = arith.constant 0 : i32
    %c0_i32_0 = arith.constant 0 : i32
    return %arg0, %c0_i32 : i32, i32
  }
}

</mosaic_0001>

<llo_original>
// kernel: tpu_custom_call.1
$region0: #{tpu_custom_call.1}
  #allocation0 [shape = 'u32[]', space=smem, size = 0x4, offset = 0x4, fixed_abs, tag = 'smem constant byte address 0x4 - core index']
  #allocation1 [shape = 'u32[144,128]{1,0:T(1,128)}', space=vmem, size = 0x12000, scoped, tag = 'internal scratch']
  %s0 = inlined_call_operand.hbm [shape: f32[2,1024], index: 0, kind: input, shape index: {}]
  %s1 = inlined_call_operand.hbm [shape: f32[2,1024], index: 1, kind: input, shape index: {}]
  %s2 = inlined_call_operand.hbm [shape: f32[2,1024], index: 2, kind: input, shape index: {}]
  %s3 = inlined_call_operand.hbm [shape: f32[2,1024], index: 3, kind: output, shape index: {}]
  %s4 = sld [smem:[#allocation0]]
  $region34: #{tpu_custom_call.1} parent=0
    _
  %s6 = ssub.s32 1, %s4
  %s7 = scalar_select 0, %s6, %s4
  $region1: #{tpu_custom_call.1} parent=0
    #allocation2 [shape = 'u8[8192]{0}', space=vmem, size = 0x2000, scoped, tag = 'input window, operand 0, single buffered']
    #allocation3 [shape = 's32[1]{0}', space=sflag, size = 0x4, scoped, tag = 'scoped memory for tpu_custom_call.1']
    #allocation4 [shape = 's32[1]{0}', space=sflag, size = 0x4, scoped, tag = 'scoped memory for tpu_custom_call.1']
    #allocation5 [shape = 'u8[8192]{0}', space=vmem, size = 0x2000, scoped, tag = 'input window, operand 1, single buffered']
    #allocation6 [shape = 's32[1]{0}', space=sflag, size = 0x4, scoped, tag = 'scoped memory for tpu_custom_call.1']
    #allocation7 [shape = 'u8[8192]{0}', space=vmem, size = 0x2000, scoped, tag = 'input window, operand 2, single buffered']
    #allocation8 [shape = 'u8[8192]{0}', space=vmem, size = 0x2000, scoped, tag = 'output window, operand 0, single buffered']
    %8 = vsyncpa [#allocation3], 0
    %9 = vsyncpa [#allocation6], 0
    %10 = vsyncpa [#allocation4], 0
    // Predicated region
    $region2: #{tpu_custom_call.1} parent=1 // pred_check
      _
    $region3: #{tpu_custom_call.1} parent=1 // pred_check_branch
      %12 = sbr.rel (0) target = $region5
    $region4: #{tpu_custom_call.1} parent=1 // pred_region
      %s14 = ssub.s32 256, 256
      %15 = vsyncadd [#allocation3], %s14
      %s17 = sshll.u32 [#allocation2], 4
      %s18 = int_to_ptr.vmem [resolvable:$true] %s17
      %20 = dma.hbm_to_vmem [thread:$0]  %s0, 256, %s18, [#allocation3]
    $region5: #{tpu_custom_call.1} parent=1 // pred_fallthru
      _
    // Predicated region
    $region6: #{tpu_custom_call.1} parent=1 // pred_check
      _
    $region7: #{tpu_custom_call.1} parent=1 // pred_check_branch
      %22 = sbr.rel (0) target = $region9
    $region8: #{tpu_custom_call.1} parent=1 // pred_region
      %s24 = ssub.s32 256, 256
      %25 = vsyncadd [#allocation6], %s24
      %s27 = sshll.u32 [#allocation5], 4
      %s28 = int_to_ptr.vmem [resolvable:$true] %s27
      %30 = dma.hbm_to_vmem [thread:$0]  %s1, 256, %s28, [#allocation6]
    $region9: #{tpu_custom_call.1} parent=1 // pred_fallthru
      _
    // Predicated region
    $region10: #{tpu_custom_call.1} parent=1 // pred_check
      _
    $region11: #{tpu_custom_call.1} parent=1 // pred_check_branch
      %32 = sbr.rel (0) target = $region13
    $region12: #{tpu_custom_call.1} parent=1 // pred_region
      %s34 = ssub.s32 256, 256
      %35 = vsyncadd [#allocation6], %s34
      %s37 = sshll.u32 [#allocation7], 4
      %s38 = int_to_ptr.vmem [resolvable:$true] %s37
      %40 = dma.hbm_to_vmem [thread:$0]  %s2, 256, %s38, [#allocation6]
    $region13: #{tpu_custom_call.1} parent=1 // pred_fallthru
      _
    // Predicated region
    $region14: #{tpu_custom_call.1} parent=1 // pred_check
      _
    $region15: #{tpu_custom_call.1} parent=1 // pred_check_branch
      %42 = sbr.rel (0) target = $region17
    $region16: #{tpu_custom_call.1} parent=1 // pred_region
      %43 = dma.done [#allocation3], 256
    $region17: #{tpu_custom_call.1} parent=1 // pred_fallthru
      _
    // Predicated region
    $region18: #{tpu_custom_call.1} parent=1 // pred_check
      _
    $region19: #{tpu_custom_call.1} parent=1 // pred_check_branch
      %45 = sbr.rel (0) target = $region21
    $region20: #{tpu_custom_call.1} parent=1 // pred_region
      %46 = dma.done [#allocation6], 256
    $region21: #{tpu_custom_call.1} parent=1 // pred_fallthru
      _
    // Predicated region
    $region22: #{tpu_custom_call.1} parent=1 // pred_check
      _
    $region23: #{tpu_custom_call.1} parent=1 // pred_check_branch
      %48 = sbr.rel (0) target = $region25
    $region24: #{tpu_custom_call.1} parent=1 // pred_region
      %49 = dma.done [#allocation6], 256
    $region25: #{tpu_custom_call.1} parent=1 // pred_fallthru
      _
    %v50 = vld [vmem:[#allocation7] sm:$0xff]
    %v51 = vld [vmem:[#allocation7 + $0x8] sm:$0xff]
    %vm52 = vcmp.lt.f32.partialorder %v50, 0.5
    %vm53 = vcmp.lt.f32.partialorder %v51, 0.5
    %v54 = vld [vmem:[#allocation2] sm:$0xff]
    %v55 = vld [vmem:[#allocation2 + $0x8] sm:$0xff]
    %v56 = vld [vmem:[#allocation5] sm:$0xff]
    %v57 = vld [vmem:[#allocation5 + $0x8] sm:$0xff]
    %v58 = vsel %vm52, %v54, %v56
    %v59 = vsel %vm53, %v55, %v57
    %60 = vst [vmem:[#allocation8] sm:$0xff] %v58
    %61 = vst [vmem:[#allocation8 + $0x8] sm:$0xff] %v59
    // Predicated region
    $region26: #{tpu_custom_call.1} parent=1 // pred_check
      _
    $region27: #{tpu_custom_call.1} parent=1 // pred_check_branch
      %63 = sbr.rel (0) target = $region29
    $region28: #{tpu_custom_call.1} parent=1 // pred_region
      %s65 = ssub.s32 256, 256
      %66 = vsyncadd [#allocation4], %s65
      %s68 = sshll.u32 [#allocation8], 4
      %s69 = int_to_ptr.vmem [resolvable:$true] %s68
      %71 = dma.vmem_to_hbm [thread:$0]  %s69, 256, %s3, [#allocation4]
    $region29: #{tpu_custom_call.1} parent=1 // pred_fallthru
      _
    // Predicated region
    $region30: #{tpu_custom_call.1} parent=1 // pred_check
      _
    $region31: #{tpu_custom_call.1} parent=1 // pred_check_branch
      %73 = sbr.rel (0) target = $region33
    $region32: #{tpu_custom_call.1} parent=1 // pred_region
      %74 = dma.done [#allocation4], 256
    $region33: #{tpu_custom_call.1} parent=1 // pred_fallthru
      _
    %75 = vsyncpa [#allocation3], 1
    %76 = vsyncpa [#allocation6], 1
    %77 = vsyncpa [#allocation4], 1

</llo_original>
